<compile_context>
chip_gen: v5e
topology: v5e:2x2
jax: 0.10.0
libtpu: 0.0.40
codegen_flags: <defaults>
</compile_context>

<pallas_src>
import functools

import jax
import jax.numpy as jnp
from jax.experimental import pallas as pl
from jax.experimental.pallas import tpu as pltpu


def _mlp_kernel(x_ref, w1_ref, b1_ref, w2_ref, b2_ref, o_ref):
    # hidden = relu(x @ W1 + b1)   -- MXU matmul, f32 accumulation
    h = jnp.dot(x_ref[...], w1_ref[...], preferred_element_type=jnp.float32)
    h = jnp.maximum(h + b1_ref[...], 0.0)           # (TB, H) + (1, H)
    # out = hidden @ W2 + b2
    o = jnp.dot(h, w2_ref[...], preferred_element_type=jnp.float32)
    o_ref[...] = (o + b2_ref[...]).astype(o_ref.dtype)


def _round_up(n, m):
    return ((n + m - 1) // m) * m


@functools.partial(jax.jit, static_argnames=("block_b", "min_pallas_batch"))
def net_forward(x, w1, b1, w2, b2, *, block_b=4096, min_pallas_batch=512):
    """x: (B, in); w1: (in, hid); b1: (1, hid); w2: (hid, out); b2: (1, out).

    Returns (B, out) == relu(x @ w1 + b1) @ w2 + b2.
    """
    B, in_size = x.shape
    hid_size = w1.shape[1]
    out_size = w2.shape[1]

    # Small-batch fast path: at DQN-typical batches the pallas_call overhead
    # dominates; XLA fuses the bias+ReLU anyway.
    if B < min_pallas_batch:
        return jnp.maximum(x @ w1 + b1, 0.0) @ w2 + b2

    # Batch tile: multiple of 8 sublanes, capped at block_b, and capped at
    # ceil(B / 2) so there are always >= 2 grid steps (keeps both v7x
    # TensorCores busy via the "parallel" batch axis).
    tb = min(block_b, _round_up(pl.cdiv(B, 2), 8))
    tb = max(tb, 8)
    grid_b = pl.cdiv(B, tb)  # ragged last tile: rows are independent, masked by Pallas

    return pl.pallas_call(
        _mlp_kernel,
        out_shape=jax.ShapeDtypeStruct((B, out_size), x.dtype),
        grid=(grid_b,),
        in_specs=[
            # x tile: pipelined (double-buffered) over the batch.
            pl.BlockSpec((tb, in_size), lambda i: (i, 0)),
            # Weights / biases: full arrays, constant index_map -> DMA'd once,
            # VMEM-resident across the whole grid.
            pl.BlockSpec((in_size, hid_size), lambda i: (0, 0)),
            pl.BlockSpec((1, hid_size), lambda i: (0, 0)),
            pl.BlockSpec((hid_size, out_size), lambda i: (0, 0)),
            pl.BlockSpec((1, out_size), lambda i: (0, 0)),
        ],
        out_specs=pl.BlockSpec((tb, out_size), lambda i: (i, 0)),
        compiler_params=pltpu.CompilerParams(
            dimension_semantics=("parallel",)),
    )(x, w1, b1, w2, b2)


def init_params(key, input_size, hidden_size, output_size):
    """Deterministic init mimicking nn.Linear's uniform(-1/sqrt(fan_in), ...)."""
    k1, k2, k3, k4 = jax.random.split(key, 4)
    bound1 = 1.0 / (input_size ** 0.5)
    bound2 = 1.0 / (hidden_size ** 0.5)
    w1 = jax.random.uniform(k1, (input_size, hidden_size), jnp.float32,
                            -bound1, bound1)
    b1 = jax.random.uniform(k2, (1, hidden_size), jnp.float32, -bound1, bound1)
    w2 = jax.random.uniform(k3, (hidden_size, output_size), jnp.float32,
                            -bound2, bound2)
    b2 = jax.random.uniform(k4, (1, output_size), jnp.float32, -bound2, bound2)
    return w1, b1, w2, b2


if __name__ == "__main__":
    input_size, hidden_size, output_size = 16, 32, 8

    key = jax.random.PRNGKey(0)
    kx, kp, kb = jax.random.split(key, 3)
    w1, b1, w2, b2 = init_params(kp, input_size, hidden_size, output_size)

    def ref_fn(xv):
        return jnp.maximum(xv @ w1 + b1, 0.0) @ w2 + b2

    # 1) Small batch forced through the Pallas kernel (min_pallas_batch=0).
    x_small = jax.random.normal(kx, (8, input_size), jnp.float32)
    out_small = net_forward(x_small, w1, b1, w2, b2, min_pallas_batch=0)
    jax.block_until_ready(out_small)
    assert out_small.shape == (8, output_size)
    assert jnp.allclose(out_small, ref_fn(x_small), atol=1e-5, rtol=1e-5)

    # 2) Default dispatch at DQN-typical batch takes the plain-XLA fast path.
    out_fast = net_forward(x_small, w1, b1, w2, b2)
    jax.block_until_ready(out_fast)
    assert jnp.allclose(out_fast, ref_fn(x_small), atol=1e-5, rtol=1e-5)

    # 3) Larger batch: 2-step pipelined Pallas grid (both TCs busy on v7x).
    x_big = jax.random.normal(kb, (1024, input_size), jnp.float32)
    out_big = net_forward(x_big, w1, b1, w2, b2)
    jax.block_until_ready(out_big)
    assert out_big.shape == (1024, output_size)
    assert jnp.allclose(out_big, ref_fn(x_big), atol=1e-5, rtol=1e-5)

    # 4) Ragged batch (not a multiple of the batch tile) exercises the
    #    masked partial-tile path.
    x_rag = jax.random.normal(jax.random.PRNGKey(3), (1000, input_size),
                              jnp.float32)
    out_rag = net_forward(x_rag, w1, b1, w2, b2)
    jax.block_until_ready(out_rag)
    assert out_rag.shape == (1000, output_size)
    assert jnp.allclose(out_rag, ref_fn(x_rag), atol=1e-5, rtol=1e-5)

    print("KERNEL_OK")
</pallas_src>

<mosaic_0001>
module attributes {stable_mosaic.version = 11 : i64} {
  func.func @_mlp_kernel(%arg0: i32, %arg1: memref<8x16xf32, #tpu.memory_space<vmem>>, %arg2: memref<16x32xf32, #tpu.memory_space<vmem>>, %arg3: memref<1x32xf32, #tpu.memory_space<vmem>>, %arg4: memref<32x8xf32, #tpu.memory_space<vmem>>, %arg5: memref<1x8xf32, #tpu.memory_space<vmem>>, %arg6: memref<8x8xf32, #tpu.memory_space<vmem>>) attributes {dimension_semantics = [#tpu.dimension_semantics<parallel>], iteration_bounds = array<i64: 1>, scalar_prefetch = 0 : i64, scratch_operands = 0 : i64, tpu.core_type = #tpu.core_type<tc>, window_params = [{transform_indices = @transform_0, window_bounds = array<i64: 8, 16>}, {pipeline_mode = #tpu.pipeline_mode<synchronous>, transform_indices = @transform_1, window_bounds = array<i64: 16, 32>}, {pipeline_mode = #tpu.pipeline_mode<synchronous>, transform_indices = @transform_2, window_bounds = array<i64: 1, 32>}, {pipeline_mode = #tpu.pipeline_mode<synchronous>, transform_indices = @transform_3, window_bounds = array<i64: 32, 8>}, {pipeline_mode = #tpu.pipeline_mode<synchronous>, transform_indices = @transform_4, window_bounds = array<i64: 1, 8>}, {transform_indices = @transform_5, window_bounds = array<i64: 8, 8>}]} {
    %c0 = arith.constant 0 : index
    %c0_0 = arith.constant 0 : index
    %0 = vector.load %arg1[%c0, %c0_0] : memref<8x16xf32, #tpu.memory_space<vmem>>, vector<8x16xf32>
    %c0_1 = arith.constant 0 : index
    %c0_2 = arith.constant 0 : index
    %1 = vector.load %arg2[%c0_1, %c0_2] : memref<16x32xf32, #tpu.memory_space<vmem>>, vector<16x32xf32>
    %cst = arith.constant dense<0.000000e+00> : vector<8x32xf32>
    %2 = tpu.matmul %0, %1, %cst {dimension_numbers = #tpu.dot_dimension_numbers<[1], [0], [0], [1], [0, 0, 1, 1], [], []>} : vector<8x16xf32>, vector<16x32xf32>, vector<8x32xf32> -> vector<8x32xf32>
    %c0_3 = arith.constant 0 : index
    %c0_4 = arith.constant 0 : index
    %3 = vector.load %arg3[%c0_3, %c0_4] : memref<1x32xf32, #tpu.memory_space<vmem>>, vector<1x32xf32>
    %4 = vector.broadcast %3 : vector<1x32xf32> to vector<8x32xf32>
    %5 = arith.addf %2, %4 : vector<8x32xf32>
    %cst_5 = arith.constant 0.000000e+00 : f32
    %6 = vector.broadcast %cst_5 : f32 to vector<8x32xf32>
    %7 = arith.maximumf %5, %6 : vector<8x32xf32>
    %c0_6 = arith.constant 0 : index
    %c0_7 = arith.constant 0 : index
    %8 = vector.load %arg4[%c0_6, %c0_7] : memref<32x8xf32, #tpu.memory_space<vmem>>, vector<32x8xf32>
    %cst_8 = arith.constant dense<0.000000e+00> : vector<8x8xf32>
    %9 = tpu.matmul %7, %8, %cst_8 {dimension_numbers = #tpu.dot_dimension_numbers<[1], [0], [0], [1], [0, 0, 1, 1], [], []>} : vector<8x32xf32>, vector<32x8xf32>, vector<8x8xf32> -> vector<8x8xf32>
    %c0_9 = arith.constant 0 : index
    %c0_10 = arith.constant 0 : index
    %10 = vector.load %arg5[%c0_9, %c0_10] : memref<1x8xf32, #tpu.memory_space<vmem>>, vector<1x8xf32>
    %11 = vector.broadcast %10 : vector<1x8xf32> to vector<8x8xf32>
    %12 = arith.addf %9, %11 : vector<8x8xf32>
    %c0_11 = arith.constant 0 : index
    %c0_12 = arith.constant 0 : index
    %13 = vector.load %arg6[%c0_11, %c0_12] : memref<8x8xf32, #tpu.memory_space<vmem>>, vector<8x8xf32>
    tpu.vector_store %arg6[%c0_11, %c0_12], %12 {strides = array<i32>} : memref<8x8xf32, #tpu.memory_space<vmem>>, vector<8x8xf32>,
    return
  }
  func.func @transform_0(%arg0: i32) -> (i32, i32) {
    %c0_i32 = arith.constant 0 : i32
    %c0_i32_0 = arith.constant 0 : i32
    return %arg0, %c0_i32 : i32, i32
  }
  func.func @transform_1(%arg0: i32) -> (i32, i32) {
    %c0_i32 = arith.constant 0 : i32
    %c0_i32_0 = arith.constant 0 : i32
    %c0_i32_1 = arith.constant 0 : i32
    return %c0_i32, %c0_i32_0 : i32, i32
  }
  func.func @transform_2(%arg0: i32) -> (i32, i32) {
    %c0_i32 = arith.constant 0 : i32
    %c0_i32_0 = arith.constant 0 : i32
    %c0_i32_1 = arith.constant 0 : i32
    return %c0_i32, %c0_i32_0 : i32, i32
  }
  func.func @transform_3(%arg0: i32) -> (i32, i32) {
    %c0_i32 = arith.constant 0 : i32
    %c0_i32_0 = arith.constant 0 : i32
    %c0_i32_1 = arith.constant 0 : i32
    return %c0_i32, %c0_i32_0 : i32, i32
  }
  func.func @transform_4(%arg0: i32) -> (i32, i32) {
    %c0_i32 = arith.constant 0 : i32
    %c0_i32_0 = arith.constant 0 : i32
    %c0_i32_1 = arith.constant 0 : i32
    return %c0_i32, %c0_i32_0 : i32, i32
  }
  func.func @transform_5(%arg0: i32) -> (i32, i32) {
    %c0_i32 = arith.constant 0 : i32
    %c0_i32_0 = arith.constant 0 : i32
    return %arg0, %c0_i32 : i32, i32
  }
}

</mosaic_0001>

<llo_original>
// kernel: net_forward.1
$region0: #{net_forward.1}
  #allocation0 [shape = 'u32[]', space=smem, size = 0x4, offset = 0x4, fixed_abs, tag = 'smem constant byte address 0x4 - core index']
  #allocation1 [shape = 'u32[72,128]{1,0:T(1,128)}', space=vmem, size = 0x9000, scoped, tag = 'internal scratch']
  %s0 = inlined_call_operand.vmem [shape: f32[8,16], index: 0, kind: input, shape index: {}]
  %s1 = inlined_call_operand.vmem [shape: f32[16,32], index: 1, kind: input, shape index: {}]
  %s2 = inlined_call_operand.vmem [shape: f32[1,32], index: 2, kind: input, shape index: {}]
  %s3 = inlined_call_operand.vmem [shape: f32[32,8], index: 3, kind: input, shape index: {}]
  %s4 = inlined_call_operand.vmem [shape: f32[1,8], index: 4, kind: input, shape index: {}]
  %s5 = inlined_call_operand.hbm [shape: f32[8,8], index: 5, kind: output, shape index: {}]
  %s6 = sld [smem:[#allocation0]]
  $region30: #{net_forward.1} parent=0
    _
  %s8 = ssub.s32 1, %s6
  %s9 = scalar_select 0, %s8, %s6
  $region1: #{net_forward.1} parent=0
    #allocation2 [shape = 'u8[4096]{0}', space=vmem, size = 0x1000, scoped, tag = 'output window, operand 0, single buffered']
    #allocation3 [shape = 's32[1]{0}', space=sflag, size = 0x4, scoped, tag = 'scoped memory for net_forward.1']
    %10 = vsyncpa [#allocation3], 0
    // Predicated region
    $region2: #{net_forward.1} parent=1 // pred_check
      _
    $region3: #{net_forward.1} parent=1 // pred_check_branch
      %12 = sbr.rel (0) target = $region5
    $region4: #{net_forward.1} parent=1 // pred_region
      _
    $region5: #{net_forward.1} parent=1 // pred_fallthru
      _
    // Predicated region
    $region6: #{net_forward.1} parent=1 // pred_check
      _
    $region7: #{net_forward.1} parent=1 // pred_check_branch
      %14 = sbr.rel (0) target = $region9
    $region8: #{net_forward.1} parent=1 // pred_region
      _
    $region9: #{net_forward.1} parent=1 // pred_fallthru
      _
    // Predicated region
    $region10: #{net_forward.1} parent=1 // pred_check
      _
    $region11: #{net_forward.1} parent=1 // pred_check_branch
      %16 = sbr.rel (0) target = $region13
    $region12: #{net_forward.1} parent=1 // pred_region
      _
    $region13: #{net_forward.1} parent=1 // pred_fallthru
      _
    // Predicated region
    $region14: #{net_forward.1} parent=1 // pred_check
      _
    $region15: #{net_forward.1} parent=1 // pred_check_branch
      %18 = sbr.rel (0) target = $region17
    $region16: #{net_forward.1} parent=1 // pred_region
      _
    $region17: #{net_forward.1} parent=1 // pred_fallthru
      _
    // Predicated region
    $region18: #{net_forward.1} parent=1 // pred_check
      _
    $region19: #{net_forward.1} parent=1 // pred_check_branch
      %20 = sbr.rel (0) target = $region21
    $region20: #{net_forward.1} parent=1 // pred_region
      _
    $region21: #{net_forward.1} parent=1 // pred_fallthru
      _
    %v21 = vld [vmem:[%s0] sm:$0xff]
    %v22 = vld [vmem:[%s1] sm:$0xff]
    %v23 = vld [vmem:[%s1 + $0x8] sm:$0xff]
    %v24 = vld [vmem:[%s2] sm:$0x1]
    %v26 = vperm.slane %v24, 0
    %vm28 = vcmask 130048
    %v30 = vsel %vm28, %v21, 0
    %32 = vmatpush.msra.mxu0 0.0
    %33 = vmatpush.msra.mxu0 0.0
    %34 = vmatpush.msra.mxu0 0.0
    %35 = vmatpush.msra.mxu0 0.0
    %36 = vmatpush.msra.mxu0 0.0
    %37 = vmatpush.msra.mxu0 0.0
    %38 = vmatpush.msra.mxu0 0.0
    %39 = vmatpush.msra.mxu0 0.0
    %40 = vmatpush.msra.mxu0 0.0
    %41 = vmatpush.msra.mxu0 0.0
    %42 = vmatpush.msra.mxu0 0.0
    %43 = vmatpush.msra.mxu0 0.0
    %44 = vmatpush.msra.mxu0 0.0
    %45 = vmatpush.msra.mxu0 0.0
    %46 = vmatpush.msra.mxu0 %v23
    %47 = vmatpush.msra.mxu0 %v22
    %48 = vmatmul.f32.gmra.mxu0 %v30
    %v49 = vpop.f32.mrf.mxu0
    %v50 = vadd.f32 %v26, %v49
    %51 = vdwg.mxu0
    %v52 = vmax.f32 %v50, 0.0
    %v53 = vld [vmem:[%s3] sm:$0xff]
    %v54 = vld [vmem:[%s3 + $0x8] sm:$0xff]
    %v55 = vld [vmem:[%s3 + $0x10] sm:$0xff]
    %v56 = vld [vmem:[%s3 + $0x18] sm:$0xff]
    %v57 = vld [vmem:[%s4] sm:$0x1]
    %v59 = vperm.slane %v57, 0
    %vm61 = vcmask 261120
    %v63 = vsel %vm61, %v52, 0
    %65 = vmatpush.msra.mxu0 0.0
    %66 = vmatpush.msra.mxu0 0.0
    %67 = vmatpush.msra.mxu0 0.0
    %68 = vmatpush.msra.mxu0 0.0
    %69 = vmatpush.msra.mxu0 0.0
    %70 = vmatpush.msra.mxu0 0.0
    %71 = vmatpush.msra.mxu0 0.0
    %72 = vmatpush.msra.mxu0 0.0
    %73 = vmatpush.msra.mxu0 0.0
    %74 = vmatpush.msra.mxu0 0.0
    %75 = vmatpush.msra.mxu0 0.0
    %76 = vmatpush.msra.mxu0 0.0
    %77 = vmatpush.msra.mxu0 %v56
    %78 = vmatpush.msra.mxu0 %v55
    %79 = vmatpush.msra.mxu0 %v54
    %80 = vmatpush.msra.mxu0 %v53
    %81 = vmatmul.f32.gmra.mxu0 %v63
    %v82 = vpop.f32.mrf.mxu0
    %v83 = vadd.f32 %v59, %v82
    %84 = vdwg.mxu0
    %vm85 = vcmask 64512
    %86 = vst.msk [vmem:[#allocation2] sm:$0xff] %vm85, %v83
    // Predicated region
    $region22: #{net_forward.1} parent=1 // pred_check
      _
    $region23: #{net_forward.1} parent=1 // pred_check_branch
      %88 = sbr.rel (0) target = $region25
    $region24: #{net_forward.1} parent=1 // pred_region
      %90 = vsyncadd [#allocation3], 0
      %s92 = sshll.u32 [#allocation2], 4
      %s93 = int_to_ptr.vmem [resolvable:$true] %s92
      %s94 = sshll.u32 %s5, 4
      %s95 = int_to_ptr.hbm [resolvable:$true] %s94
      %97 = dma.vmem_to_hbm [thread:$0]  %s93, 128, %s95, [#allocation3]
    $region25: #{net_forward.1} parent=1 // pred_fallthru
      _
    // Predicated region
    $region26: #{net_forward.1} parent=1 // pred_check
      _
    $region27: #{net_forward.1} parent=1 // pred_check_branch
      %99 = sbr.rel (0) target = $region29
    $region28: #{net_forward.1} parent=1 // pred_region
      %101 = dma.done [#allocation3], 128
    $region29: #{net_forward.1} parent=1 // pred_fallthru
      _
    %102 = vsyncpa [#allocation3], 1

</llo_original>
